<compile_context>
chip_gen: v6e
topology: v6e:2x2x1
jax: 0.10.0
libtpu: 0.0.40
codegen_flags: <defaults>
</compile_context>

<pallas_src>
import jax
import jax.numpy as jnp
from jax.experimental import pallas as pl
from jax.experimental.pallas import tpu as pltpu


def make_rnn_kernel(S, B):
    def rnn_kernel(x_ref, wih_t_ref, whh_t_ref, bias_ref,
                   wlin_t_ref, blin_ref, out_ref):
        # Hoisted input projection: one (S*B, D) x (D, H) MXU matmul with the
        # folded bias (b_ih + b_hh).  This does not sit on the serial chain.
        proj = (jnp.dot(x_ref[...], wih_t_ref[...],
                        preferred_element_type=jnp.float32)
                + bias_ref[...])                       # (S*B, H)

        whh_t = whh_t_ref[...]                         # (H, H), loaded once

        # Serial recurrence, hidden state lives in vregs as a loop carry.
        # Peel step 0 (h0 == 0 -> no matmul needed), fully unroll the rest.
        h = jnp.tanh(proj[0:B, :])                     # (B, H)
        for t in range(1, S):
            pre = proj[t * B:(t + 1) * B, :] + jnp.dot(
                h, whh_t, preferred_element_type=jnp.float32)
            h = jnp.tanh(pre)

        # Classifier head + numerically-stable LogSoftmax(dim=1).
        logits = (jnp.dot(h, wlin_t_ref[...],
                          preferred_element_type=jnp.float32)
                  + blin_ref[...])                     # (B, C)
        m = jnp.max(logits, axis=1, keepdims=True)
        s = logits - m
        lse = jnp.log(jnp.sum(jnp.exp(s), axis=1, keepdims=True))
        out_ref[...] = s - lse

    return rnn_kernel


@jax.jit
def rnn_forward(inputs, w_ih, w_hh, b_ih, b_hh, w_lin, b_lin):
    """inputs: (S, B, D) float32.  Returns (B, 5) log-probs (matches PyTorch)."""
    S, B, D = inputs.shape
    H = w_ih.shape[0]
    C = w_lin.shape[0]

    # Wrapper-side (one-time) weight prep: pre-transpose so the kernel does
    # plain (M,K)x(K,N) matmuls; fold the two RNN biases into one row vector.
    x2d = jnp.asarray(inputs, jnp.float32).reshape(S * B, D)
    w_ih_t = jnp.asarray(w_ih.T, jnp.float32)           # (D, H)
    w_hh_t = jnp.asarray(w_hh.T, jnp.float32)           # (H, H)
    w_lin_t = jnp.asarray(w_lin.T, jnp.float32)         # (H, C)
    bias = jnp.asarray((b_ih + b_hh).reshape(1, H), jnp.float32)
    b_lin2 = jnp.asarray(b_lin.reshape(1, C), jnp.float32)

    kernel = make_rnn_kernel(S, B)

    vmem = pl.BlockSpec(memory_space=pltpu.MemorySpace.VMEM)
    return pl.pallas_call(
        kernel,
        out_shape=jax.ShapeDtypeStruct((B, C), jnp.float32),
        in_specs=[vmem] * 6,
        out_specs=vmem,
    )(x2d, w_ih_t, w_hh_t, bias, w_lin_t, b_lin2)


def reference_forward(inputs, w_ih, w_hh, b_ih, b_hh, w_lin, b_lin):
    S, B, D = inputs.shape
    H = w_ih.shape[0]
    h = jnp.zeros((B, H), jnp.float32)
    for t in range(S):
        h = jnp.tanh(inputs[t] @ w_ih.T + b_ih + h @ w_hh.T + b_hh)
    logits = h @ w_lin.T + b_lin
    return jax.nn.log_softmax(logits, axis=1)


if __name__ == "__main__":
    # Small shapes consistent with the module: seq=8, batch=8, input_dim=32, h=32
    S, B, D, H, C = 8, 8, 32, 32, 5

    key = jax.random.PRNGKey(0)
    ks = jax.random.split(key, 8)
    bound = 1.0 / (H ** 0.5)  # PyTorch default uniform init bound

    inputs = jax.random.normal(ks[0], (S, B, D), jnp.float32)
    w_ih = jax.random.uniform(ks[1], (H, D), jnp.float32, -bound, bound)
    w_hh = jax.random.uniform(ks[2], (H, H), jnp.float32, -bound, bound)
    b_ih = jax.random.uniform(ks[3], (H,), jnp.float32, -bound, bound)
    b_hh = jax.random.uniform(ks[4], (H,), jnp.float32, -bound, bound)
    w_lin = jax.random.uniform(ks[5], (C, H), jnp.float32, -bound, bound)
    b_lin = jax.random.uniform(ks[6], (C,), jnp.float32, -bound, bound)

    out = rnn_forward(inputs, w_ih, w_hh, b_ih, b_hh, w_lin, b_lin)
    out = jax.block_until_ready(out)

    ref = reference_forward(inputs, w_ih, w_hh, b_ih, b_hh, w_lin, b_lin)
    assert out.shape == (B, C)
    assert jnp.allclose(out, ref, atol=1e-5, rtol=1e-5), "mismatch vs reference"

    print("KERNEL_OK")
</pallas_src>

<mosaic_0001>
module attributes {stable_mosaic.version = 11 : i64} {
  func.func @rnn_kernel(%arg0: memref<64x32xf32, #tpu.memory_space<vmem>>, %arg1: memref<32x32xf32, #tpu.memory_space<vmem>>, %arg2: memref<32x32xf32, #tpu.memory_space<vmem>>, %arg3: memref<1x32xf32, #tpu.memory_space<vmem>>, %arg4: memref<32x5xf32, #tpu.memory_space<vmem>>, %arg5: memref<1x5xf32, #tpu.memory_space<vmem>>, %arg6: memref<8x5xf32, #tpu.memory_space<vmem>>) attributes {dimension_semantics = [], scalar_prefetch = 0 : i64, scratch_operands = 0 : i64, tpu.core_type = #tpu.core_type<tc>} {
    %c0 = arith.constant 0 : index
    %c0_0 = arith.constant 0 : index
    %0 = vector.load %arg0[%c0, %c0_0] : memref<64x32xf32, #tpu.memory_space<vmem>>, vector<64x32xf32>
    %c0_1 = arith.constant 0 : index
    %c0_2 = arith.constant 0 : index
    %1 = vector.load %arg1[%c0_1, %c0_2] : memref<32x32xf32, #tpu.memory_space<vmem>>, vector<32x32xf32>
    %cst = arith.constant dense<0.000000e+00> : vector<64x32xf32>
    %2 = tpu.matmul %0, %1, %cst {dimension_numbers = #tpu.dot_dimension_numbers<[1], [0], [0], [1], [0, 0, 1, 1], [], []>} : vector<64x32xf32>, vector<32x32xf32>, vector<64x32xf32> -> vector<64x32xf32>
    %c0_3 = arith.constant 0 : index
    %c0_4 = arith.constant 0 : index
    %3 = vector.load %arg3[%c0_3, %c0_4] : memref<1x32xf32, #tpu.memory_space<vmem>>, vector<1x32xf32>
    %4 = vector.broadcast %3 : vector<1x32xf32> to vector<64x32xf32>
    %5 = arith.addf %2, %4 : vector<64x32xf32>
    %c0_5 = arith.constant 0 : index
    %c0_6 = arith.constant 0 : index
    %6 = vector.load %arg2[%c0_5, %c0_6] : memref<32x32xf32, #tpu.memory_space<vmem>>, vector<32x32xf32>
    %7 = vector.extract_strided_slice %5 {offsets = [0, 0], sizes = [8, 32], strides = [1, 1]} : vector<64x32xf32> to vector<8x32xf32>
    %8 = math.tanh %7 : vector<8x32xf32>
    %9 = vector.extract_strided_slice %5 {offsets = [8, 0], sizes = [8, 32], strides = [1, 1]} : vector<64x32xf32> to vector<8x32xf32>
    %cst_7 = arith.constant dense<0.000000e+00> : vector<8x32xf32>
    %10 = tpu.matmul %8, %6, %cst_7 {dimension_numbers = #tpu.dot_dimension_numbers<[1], [0], [0], [1], [0, 0, 1, 1], [], []>} : vector<8x32xf32>, vector<32x32xf32>, vector<8x32xf32> -> vector<8x32xf32>
    %11 = arith.addf %9, %10 : vector<8x32xf32>
    %12 = math.tanh %11 : vector<8x32xf32>
    %13 = vector.extract_strided_slice %5 {offsets = [16, 0], sizes = [8, 32], strides = [1, 1]} : vector<64x32xf32> to vector<8x32xf32>
    %cst_8 = arith.constant dense<0.000000e+00> : vector<8x32xf32>
    %14 = tpu.matmul %12, %6, %cst_8 {dimension_numbers = #tpu.dot_dimension_numbers<[1], [0], [0], [1], [0, 0, 1, 1], [], []>} : vector<8x32xf32>, vector<32x32xf32>, vector<8x32xf32> -> vector<8x32xf32>
    %15 = arith.addf %13, %14 : vector<8x32xf32>
    %16 = math.tanh %15 : vector<8x32xf32>
    %17 = vector.extract_strided_slice %5 {offsets = [24, 0], sizes = [8, 32], strides = [1, 1]} : vector<64x32xf32> to vector<8x32xf32>
    %cst_9 = arith.constant dense<0.000000e+00> : vector<8x32xf32>
    %18 = tpu.matmul %16, %6, %cst_9 {dimension_numbers = #tpu.dot_dimension_numbers<[1], [0], [0], [1], [0, 0, 1, 1], [], []>} : vector<8x32xf32>, vector<32x32xf32>, vector<8x32xf32> -> vector<8x32xf32>
    %19 = arith.addf %17, %18 : vector<8x32xf32>
    %20 = math.tanh %19 : vector<8x32xf32>
    %21 = vector.extract_strided_slice %5 {offsets = [32, 0], sizes = [8, 32], strides = [1, 1]} : vector<64x32xf32> to vector<8x32xf32>
    %cst_10 = arith.constant dense<0.000000e+00> : vector<8x32xf32>
    %22 = tpu.matmul %20, %6, %cst_10 {dimension_numbers = #tpu.dot_dimension_numbers<[1], [0], [0], [1], [0, 0, 1, 1], [], []>} : vector<8x32xf32>, vector<32x32xf32>, vector<8x32xf32> -> vector<8x32xf32>
    %23 = arith.addf %21, %22 : vector<8x32xf32>
    %24 = math.tanh %23 : vector<8x32xf32>
    %25 = vector.extract_strided_slice %5 {offsets = [40, 0], sizes = [8, 32], strides = [1, 1]} : vector<64x32xf32> to vector<8x32xf32>
    %cst_11 = arith.constant dense<0.000000e+00> : vector<8x32xf32>
    %26 = tpu.matmul %24, %6, %cst_11 {dimension_numbers = #tpu.dot_dimension_numbers<[1], [0], [0], [1], [0, 0, 1, 1], [], []>} : vector<8x32xf32>, vector<32x32xf32>, vector<8x32xf32> -> vector<8x32xf32>
    %27 = arith.addf %25, %26 : vector<8x32xf32>
    %28 = math.tanh %27 : vector<8x32xf32>
    %29 = vector.extract_strided_slice %5 {offsets = [48, 0], sizes = [8, 32], strides = [1, 1]} : vector<64x32xf32> to vector<8x32xf32>
    %cst_12 = arith.constant dense<0.000000e+00> : vector<8x32xf32>
    %30 = tpu.matmul %28, %6, %cst_12 {dimension_numbers = #tpu.dot_dimension_numbers<[1], [0], [0], [1], [0, 0, 1, 1], [], []>} : vector<8x32xf32>, vector<32x32xf32>, vector<8x32xf32> -> vector<8x32xf32>
    %31 = arith.addf %29, %30 : vector<8x32xf32>
    %32 = math.tanh %31 : vector<8x32xf32>
    %33 = vector.extract_strided_slice %5 {offsets = [56, 0], sizes = [8, 32], strides = [1, 1]} : vector<64x32xf32> to vector<8x32xf32>
    %cst_13 = arith.constant dense<0.000000e+00> : vector<8x32xf32>
    %34 = tpu.matmul %32, %6, %cst_13 {dimension_numbers = #tpu.dot_dimension_numbers<[1], [0], [0], [1], [0, 0, 1, 1], [], []>} : vector<8x32xf32>, vector<32x32xf32>, vector<8x32xf32> -> vector<8x32xf32>
    %35 = arith.addf %33, %34 : vector<8x32xf32>
    %36 = math.tanh %35 : vector<8x32xf32>
    %c0_14 = arith.constant 0 : index
    %c0_15 = arith.constant 0 : index
    %37 = vector.load %arg4[%c0_14, %c0_15] : memref<32x5xf32, #tpu.memory_space<vmem>>, vector<32x5xf32>
    %cst_16 = arith.constant dense<0.000000e+00> : vector<8x5xf32>
    %38 = tpu.matmul %36, %37, %cst_16 {dimension_numbers = #tpu.dot_dimension_numbers<[1], [0], [0], [1], [0, 0, 1, 1], [], []>} : vector<8x32xf32>, vector<32x5xf32>, vector<8x5xf32> -> vector<8x5xf32>
    %c0_17 = arith.constant 0 : index
    %c0_18 = arith.constant 0 : index
    %39 = vector.load %arg5[%c0_17, %c0_18] : memref<1x5xf32, #tpu.memory_space<vmem>>, vector<1x5xf32>
    %40 = vector.broadcast %39 : vector<1x5xf32> to vector<8x5xf32>
    %41 = arith.addf %38, %40 : vector<8x5xf32>
    %cst_19 = arith.constant dense<0xFF800000> : vector<8xf32>
    %42 = vector.multi_reduction <maximumf>, %41, %cst_19 [1] : vector<8x5xf32> to vector<8xf32>
    %43 = vector.shape_cast %42 : vector<8xf32> to vector<8x1xf32>
    %44 = vector.broadcast %43 : vector<8x1xf32> to vector<8x5xf32>
    %45 = arith.subf %41, %44 : vector<8x5xf32>
    %46 = math.exp %45 : vector<8x5xf32>
    %cst_20 = arith.constant dense<0.000000e+00> : vector<8xf32>
    %47 = vector.multi_reduction <add>, %46, %cst_20 [1] : vector<8x5xf32> to vector<8xf32>
    %48 = vector.shape_cast %47 : vector<8xf32> to vector<8x1xf32>
    %49 = math.log %48 : vector<8x1xf32>
    %50 = vector.broadcast %49 : vector<8x1xf32> to vector<8x5xf32>
    %51 = arith.subf %45, %50 : vector<8x5xf32>
    %c0_21 = arith.constant 0 : index
    %c0_22 = arith.constant 0 : index
    %52 = vector.load %arg6[%c0_21, %c0_22] : memref<8x5xf32, #tpu.memory_space<vmem>>, vector<8x5xf32>
    tpu.vector_store %arg6[%c0_21, %c0_22], %51 {strides = array<i32>} : memref<8x5xf32, #tpu.memory_space<vmem>>, vector<8x5xf32>,
    return
  }
}

</mosaic_0001>

<llo_original>
// kernel: rnn_forward.1
$region0: #{rnn_forward.1}
  #allocation0 [shape = 'u32[]', space=smem, size = 0x4, offset = 0x4, fixed_abs, tag = 'smem constant byte address 0x4 - core index']
  #allocation1 [shape = 'u32[144,128]{1,0:T(1,128)}', space=vmem, size = 0x12000, scoped, tag = 'internal scratch']
  %s0 = inlined_call_operand.vmem [shape: f32[64,32], index: 0, kind: input, shape index: {}]
  %s1 = inlined_call_operand.vmem [shape: f32[32,32], index: 1, kind: input, shape index: {}]
  %s2 = inlined_call_operand.vmem [shape: f32[32,32], index: 2, kind: input, shape index: {}]
  %s3 = inlined_call_operand.vmem [shape: f32[1,32], index: 3, kind: input, shape index: {}]
  %s4 = inlined_call_operand.vmem [shape: f32[32,5], index: 4, kind: input, shape index: {}]
  %s5 = inlined_call_operand.vmem [shape: f32[1,5], index: 5, kind: input, shape index: {}]
  %s6 = inlined_call_operand.hbm [shape: f32[8,5], index: 6, kind: output, shape index: {}]
  %s7 = sld [smem:[#allocation0]]
  $region34: #{rnn_forward.1} parent=0
    _
  %s9 = ssub.s32 1, %s7
  %s10 = scalar_select 0, %s9, %s7
  $region1: #{rnn_forward.1} parent=0
    #allocation2 [shape = 'u8[4096]{0}', space=vmem, size = 0x1000, scoped, tag = 'output window, operand 0, single buffered']
    #allocation3 [shape = 's32[1]{0}', space=sflag, size = 0x4, scoped, tag = 'scoped memory for rnn_forward.1']
    %11 = vsyncpa [#allocation3], 0
    // Predicated region
    $region2: #{rnn_forward.1} parent=1 // pred_check
      _
    $region3: #{rnn_forward.1} parent=1 // pred_check_branch
      %13 = sbr.rel (0) target = $region5
    $region4: #{rnn_forward.1} parent=1 // pred_region
      _
    $region5: #{rnn_forward.1} parent=1 // pred_fallthru
      _
    // Predicated region
    $region6: #{rnn_forward.1} parent=1 // pred_check
      _
    $region7: #{rnn_forward.1} parent=1 // pred_check_branch
      %15 = sbr.rel (0) target = $region9
    $region8: #{rnn_forward.1} parent=1 // pred_region
      _
    $region9: #{rnn_forward.1} parent=1 // pred_fallthru
      _
    // Predicated region
    $region10: #{rnn_forward.1} parent=1 // pred_check
      _
    $region11: #{rnn_forward.1} parent=1 // pred_check_branch
      %17 = sbr.rel (0) target = $region13
    $region12: #{rnn_forward.1} parent=1 // pred_region
      _
    $region13: #{rnn_forward.1} parent=1 // pred_fallthru
      _
    // Predicated region
    $region14: #{rnn_forward.1} parent=1 // pred_check
      _
    $region15: #{rnn_forward.1} parent=1 // pred_check_branch
      %19 = sbr.rel (0) target = $region17
    $region16: #{rnn_forward.1} parent=1 // pred_region
      _
    $region17: #{rnn_forward.1} parent=1 // pred_fallthru
      _
    // Predicated region
    $region18: #{rnn_forward.1} parent=1 // pred_check
      _
    $region19: #{rnn_forward.1} parent=1 // pred_check_branch
      %21 = sbr.rel (0) target = $region21
    $region20: #{rnn_forward.1} parent=1 // pred_region
      _
    $region21: #{rnn_forward.1} parent=1 // pred_fallthru
      _
    // Predicated region
    $region22: #{rnn_forward.1} parent=1 // pred_check
      _
    $region23: #{rnn_forward.1} parent=1 // pred_check_branch
      %23 = sbr.rel (0) target = $region25
    $region24: #{rnn_forward.1} parent=1 // pred_region
      _
    $region25: #{rnn_forward.1} parent=1 // pred_fallthru
      _
    %v24 = vld [vmem:[%s0] sm:$0xff]
    %v25 = vld [vmem:[%s0 + $0x8] sm:$0xff]
    %v26 = vld [vmem:[%s0 + $0x10] sm:$0xff]
    %v27 = vld [vmem:[%s0 + $0x18] sm:$0xff]
    %v28 = vld [vmem:[%s0 + $0x20] sm:$0xff]
    %v29 = vld [vmem:[%s0 + $0x28] sm:$0xff]
    %v30 = vld [vmem:[%s0 + $0x30] sm:$0xff]
    %v31 = vld [vmem:[%s0 + $0x38] sm:$0xff]
    %v32 = vld [vmem:[%s1] sm:$0xff]
    %v33 = vld [vmem:[%s1 + $0x8] sm:$0xff]
    %v34 = vld [vmem:[%s1 + $0x10] sm:$0xff]
    %v35 = vld [vmem:[%s1 + $0x18] sm:$0xff]
    %v36 = vld [vmem:[%s3] sm:$0x1]
    %v38 = vlaneseq
    %v39 = vshrl.u32 %v38, 7
    %v40 = vsub.s32 0, %v39
    %v41 = vrot.slane %v36, %v40
    %vm43 = vcmask 261120
    %v45 = vsel %vm43, %v24, 0
    %v48 = vsel %vm43, %v25, 0
    %v51 = vsel %vm43, %v26, 0
    %v54 = vsel %vm43, %v27, 0
    %v57 = vsel %vm43, %v28, 0
    %v60 = vsel %vm43, %v29, 0
    %v63 = vsel %vm43, %v30, 0
    %v66 = vsel %vm43, %v31, 0
    %68 = vmatprep.subr.mxu0 0.0
    %69 = vmatpush1.msra.mxu0 0.0
    %70 = vmatprep.subr.mxu0 0.0
    %71 = vmatpush1.msra.mxu0 0.0
    %72 = vmatprep.subr.mxu0 0.0
    %73 = vmatpush1.msra.mxu0 0.0
    %74 = vmatprep.subr.mxu0 0.0
    %75 = vmatpush1.msra.mxu0 0.0
    %76 = vmatprep.subr.mxu0 0.0
    %77 = vmatpush1.msra.mxu0 0.0
    %78 = vmatprep.subr.mxu0 0.0
    %79 = vmatpush1.msra.mxu0 0.0
    %80 = vmatprep.subr.mxu0 0.0
    %81 = vmatpush1.msra.mxu0 0.0
    %82 = vmatprep.subr.mxu0 0.0
    %83 = vmatpush1.msra.mxu0 0.0
    %84 = vmatprep.subr.mxu0 0.0
    %85 = vmatpush1.msra.mxu0 0.0
    %86 = vmatprep.subr.mxu0 0.0
    %87 = vmatpush1.msra.mxu0 0.0
    %88 = vmatprep.subr.mxu0 0.0
    %89 = vmatpush1.msra.mxu0 0.0
    %90 = vmatprep.subr.mxu0 0.0
    %91 = vmatpush1.msra.mxu0 0.0
    %92 = vmatprep.subr.mxu0 0.0
    %93 = vmatpush1.msra.mxu0 %v35
    %94 = vmatprep.subr.mxu0 0.0
    %95 = vmatpush1.msra.mxu0 %v34
    %96 = vmatprep.subr.mxu0 0.0
    %97 = vmatpush1.msra.mxu0 %v33
    %98 = vmatprep.subr.mxu0 0.0
    %99 = vmatpush1.msra.mxu0 %v32
    %100 = vmatprep.subr.mxu0 0.0
    %101 = vmatpush2.msra.mxu0 0.0
    %102 = vmatprep.subr.mxu0 0.0
    %103 = vmatpush2.msra.mxu0 0.0
    %104 = vmatprep.subr.mxu0 0.0
    %105 = vmatpush2.msra.mxu0 0.0
    %106 = vmatprep.subr.mxu0 0.0
    %107 = vmatpush2.msra.mxu0 0.0
    %108 = vmatprep.subr.mxu0 0.0
    %109 = vmatpush2.msra.mxu0 0.0
    %110 = vmatprep.subr.mxu0 0.0
    %111 = vmatpush2.msra.mxu0 0.0
    %112 = vmatprep.subr.mxu0 0.0
    %113 = vmatpush2.msra.mxu0 0.0
    %114 = vmatprep.subr.mxu0 0.0
    %115 = vmatpush2.msra.mxu0 0.0
    %116 = vmatprep.subr.mxu0 0.0
    %117 = vmatpush2.msra.mxu0 0.0
    %118 = vmatprep.subr.mxu0 0.0
    %119 = vmatpush2.msra.mxu0 0.0
    %120 = vmatprep.subr.mxu0 0.0
    %121 = vmatpush2.msra.mxu0 0.0
    %122 = vmatprep.subr.mxu0 0.0
    %123 = vmatpush2.msra.mxu0 0.0
    %124 = vmatprep.subr.mxu0 0.0
    %125 = vmatpush2.msra.mxu0 0.0
    %126 = vmatprep.subr.mxu0 0.0
    %127 = vmatpush2.msra.mxu0 0.0
    %128 = vmatprep.subr.mxu0 0.0
    %129 = vmatpush2.msra.mxu0 0.0
    %130 = vmatprep.subr.mxu0 0.0
    %131 = vmatpush2.msra.mxu0 0.0
    %132 = vmatprep.mubr.f32.mxu0 0.0
    %133 = vmatmul.mubr.f32.gmra.mxu0 %v45
    %v134 = vpop.f32.mrf.mxu0
    %v135 = vadd.f32 %v41, %v134
    %v136 = vpop.f32.mrf.mxu0
    %137 = vmatprep.mubr.f32.mxu0 0.0
    %138 = vmatmul.mubr.f32.gmra.mxu0 %v48
    %v139 = vpop.f32.mrf.mxu0
    %v140 = vadd.f32 %v41, %v139
    %v141 = vpop.f32.mrf.mxu0
    %142 = vmatprep.mubr.f32.mxu0 0.0
    %143 = vmatmul.mubr.f32.gmra.mxu0 %v51
    %v144 = vpop.f32.mrf.mxu0
    %v145 = vadd.f32 %v41, %v144
    %v146 = vpop.f32.mrf.mxu0
    %147 = vmatprep.mubr.f32.mxu0 0.0
    %148 = vmatmul.mubr.f32.gmra.mxu0 %v54
    %v149 = vpop.f32.mrf.mxu0
    %v150 = vadd.f32 %v41, %v149
    %v151 = vpop.f32.mrf.mxu0
    %152 = vmatprep.mubr.f32.mxu0 0.0
    %153 = vmatmul.mubr.f32.gmra.mxu0 %v57
    %v154 = vpop.f32.mrf.mxu0
    %v155 = vadd.f32 %v41, %v154
    %v156 = vpop.f32.mrf.mxu0
    %157 = vmatprep.mubr.f32.mxu0 0.0
    %158 = vmatmul.mubr.f32.gmra.mxu0 %v60
    %v159 = vpop.f32.mrf.mxu0
    %v160 = vadd.f32 %v41, %v159
    %v161 = vpop.f32.mrf.mxu0
    %162 = vmatprep.mubr.f32.mxu0 0.0
    %163 = vmatmul.mubr.f32.gmra.mxu0 %v63
    %v164 = vpop.f32.mrf.mxu0
    %v165 = vadd.f32 %v41, %v164
    %v166 = vpop.f32.mrf.mxu0
    %167 = vmatprep.mubr.f32.mxu0 0.0
    %168 = vmatmul.mubr.f32.gmra.mxu0 %v66
    %v169 = vpop.f32.mrf.mxu0
    %v170 = vadd.f32 %v41, %v169
    %v171 = vpop.f32.mrf.mxu0
    %172 = vdwg.mxu0
    %v173 = vld [vmem:[%s2] sm:$0xff]
    %v174 = vld [vmem:[%s2 + $0x8] sm:$0xff]
    %v175 = vld [vmem:[%s2 + $0x10] sm:$0xff]
    %v176 = vld [vmem:[%s2 + $0x18] sm:$0xff]
    %v177 = vtanh.pop %v135
    %v179 = vsel %vm43, %v177, 0
    %181 = vmatprep.subr.mxu0 0.0
    %182 = vmatpush1.msra.mxu0 0.0
    %183 = vmatprep.subr.mxu0 0.0
    %184 = vmatpush1.msra.mxu0 0.0
    %185 = vmatprep.subr.mxu0 0.0
    %186 = vmatpush1.msra.mxu0 0.0
    %187 = vmatprep.subr.mxu0 0.0
    %188 = vmatpush1.msra.mxu0 0.0
    %189 = vmatprep.subr.mxu0 0.0
    %190 = vmatpush1.msra.mxu0 0.0
    %191 = vmatprep.subr.mxu0 0.0
    %192 = vmatpush1.msra.mxu0 0.0
    %193 = vmatprep.subr.mxu0 0.0
    %194 = vmatpush1.msra.mxu0 0.0
    %195 = vmatprep.subr.mxu0 0.0
    %196 = vmatpush1.msra.mxu0 0.0
    %197 = vmatprep.subr.mxu0 0.0
    %198 = vmatpush1.msra.mxu0 0.0
    %199 = vmatprep.subr.mxu0 0.0
    %200 = vmatpush1.msra.mxu0 0.0
    %201 = vmatprep.subr.mxu0 0.0
    %202 = vmatpush1.msra.mxu0 0.0
    %203 = vmatprep.subr.mxu0 0.0
    %204 = vmatpush1.msra.mxu0 0.0
    %205 = vmatprep.subr.mxu0 0.0
    %206 = vmatpush1.msra.mxu0 %v176
    %207 = vmatprep.subr.mxu0 0.0
    %208 = vmatpush1.msra.mxu0 %v175
    %209 = vmatprep.subr.mxu0 0.0
    %210 = vmatpush1.msra.mxu0 %v174
    %211 = vmatprep.subr.mxu0 0.0
    %212 = vmatpush1.msra.mxu0 %v173
    %213 = vmatprep.subr.mxu0 0.0
    %214 = vmatpush2.msra.mxu0 0.0
    %215 = vmatprep.subr.mxu0 0.0
    %216 = vmatpush2.msra.mxu0 0.0
    %217 = vmatprep.subr.mxu0 0.0
    %218 = vmatpush2.msra.mxu0 0.0
    %219 = vmatprep.subr.mxu0 0.0
    %220 = vmatpush2.msra.mxu0 0.0
    %221 = vmatprep.subr.mxu0 0.0
    %222 = vmatpush2.msra.mxu0 0.0
    %223 = vmatprep.subr.mxu0 0.0
    %224 = vmatpush2.msra.mxu0 0.0
    %225 = vmatprep.subr.mxu0 0.0
    %226 = vmatpush2.msra.mxu0 0.0
    %227 = vmatprep.subr.mxu0 0.0
    %228 = vmatpush2.msra.mxu0 0.0
    %229 = vmatprep.subr.mxu0 0.0
    %230 = vmatpush2.msra.mxu0 0.0
    %231 = vmatprep.subr.mxu0 0.0
    %232 = vmatpush2.msra.mxu0 0.0
    %233 = vmatprep.subr.mxu0 0.0
    %234 = vmatpush2.msra.mxu0 0.0
    %235 = vmatprep.subr.mxu0 0.0
    %236 = vmatpush2.msra.mxu0 0.0
    %237 = vmatprep.subr.mxu0 0.0
    %238 = vmatpush2.msra.mxu0 0.0
    %239 = vmatprep.subr.mxu0 0.0
    %240 = vmatpush2.msra.mxu0 0.0
    %241 = vmatprep.subr.mxu0 0.0
    %242 = vmatpush2.msra.mxu0 0.0
    %243 = vmatprep.subr.mxu0 0.0
    %244 = vmatpush2.msra.mxu0 0.0
    %245 = vmatprep.mubr.f32.mxu0 0.0
    %246 = vmatmul.mubr.f32.gmra.mxu0 %v179
    %v247 = vpop.f32.mrf.mxu0
    %v248 = vadd.f32 0.0, %v247
    %v249 = vpop.f32.mrf.mxu0
    %250 = vdwg.mxu0
    %v251 = vadd.f32 %v140, %v248
    %v252 = vtanh.pop %v251
    %v254 = vsel %vm43, %v252, 0
    %256 = vmatprep.subr.mxu0 0.0
    %257 = vmatpush1.msra.mxu0 0.0
    %258 = vmatprep.subr.mxu0 0.0
    %259 = vmatpush1.msra.mxu0 0.0
    %260 = vmatprep.subr.mxu0 0.0
    %261 = vmatpush1.msra.mxu0 0.0
    %262 = vmatprep.subr.mxu0 0.0
    %263 = vmatpush1.msra.mxu0 0.0
    %264 = vmatprep.subr.mxu0 0.0
    %265 = vmatpush1.msra.mxu0 0.0
    %266 = vmatprep.subr.mxu0 0.0
    %267 = vmatpush1.msra.mxu0 0.0
    %268 = vmatprep.subr.mxu0 0.0
    %269 = vmatpush1.msra.mxu0 0.0
    %270 = vmatprep.subr.mxu0 0.0
    %271 = vmatpush1.msra.mxu0 0.0
    %272 = vmatprep.subr.mxu0 0.0
    %273 = vmatpush1.msra.mxu0 0.0
    %274 = vmatprep.subr.mxu0 0.0
    %275 = vmatpush1.msra.mxu0 0.0
    %276 = vmatprep.subr.mxu0 0.0
    %277 = vmatpush1.msra.mxu0 0.0
    %278 = vmatprep.subr.mxu0 0.0
    %279 = vmatpush1.msra.mxu0 0.0
    %280 = vmatprep.subr.mxu0 0.0
    %281 = vmatpush1.msra.mxu0 %v176
    %282 = vmatprep.subr.mxu0 0.0
    %283 = vmatpush1.msra.mxu0 %v175
    %284 = vmatprep.subr.mxu0 0.0
    %285 = vmatpush1.msra.mxu0 %v174
    %286 = vmatprep.subr.mxu0 0.0
    %287 = vmatpush1.msra.mxu0 %v173
    %288 = vmatprep.subr.mxu0 0.0
    %289 = vmatpush2.msra.mxu0 0.0
    %290 = vmatprep.subr.mxu0 0.0
    %291 = vmatpush2.msra.mxu0 0.0
    %292 = vmatprep.subr.mxu0 0.0
    %293 = vmatpush2.msra.mxu0 0.0
    %294 = vmatprep.subr.mxu0 0.0
    %295 = vmatpush2.msra.mxu0 0.0
    %296 = vmatprep.subr.mxu0 0.0
    %297 = vmatpush2.msra.mxu0 0.0
    %298 = vmatprep.subr.mxu0 0.0
    %299 = vmatpush2.msra.mxu0 0.0
    %300 = vmatprep.subr.mxu0 0.0
    %301 = vmatpush2.msra.mxu0 0.0
    %302 = vmatprep.subr.mxu0 0.0
    %303 = vmatpush2.msra.mxu0 0.0
    %304 = vmatprep.subr.mxu0 0.0
    %305 = vmatpush2.msra.mxu0 0.0
    %306 = vmatprep.subr.mxu0 0.0
    %307 = vmatpush2.msra.mxu0 0.0
    %308 = vmatprep.subr.mxu0 0.0
    %309 = vmatpush2.msra.mxu0 0.0
    %310 = vmatprep.subr.mxu0 0.0
    %311 = vmatpush2.msra.mxu0 0.0
    %312 = vmatprep.subr.mxu0 0.0
    %313 = vmatpush2.msra.mxu0 0.0
    %314 = vmatprep.subr.mxu0 0.0
    %315 = vmatpush2.msra.mxu0 0.0
    %316 = vmatprep.subr.mxu0 0.0
    %317 = vmatpush2.msra.mxu0 0.0
    %318 = vmatprep.subr.mxu0 0.0
    %319 = vmatpush2.msra.mxu0 0.0
    %320 = vmatprep.mubr.f32.mxu0 0.0
    %321 = vmatmul.mubr.f32.gmra.mxu0 %v254
    %v322 = vpop.f32.mrf.mxu0
    %v323 = vadd.f32 0.0, %v322
    %v324 = vpop.f32.mrf.mxu0
    %325 = vdwg.mxu0
    %v326 = vadd.f32 %v145, %v323
    %v327 = vtanh.pop %v326
    %v329 = vsel %vm43, %v327, 0
    %331 = vmatprep.subr.mxu0 0.0
    %332 = vmatpush1.msra.mxu0 0.0
    %333 = vmatprep.subr.mxu0 0.0
    %334 = vmatpush1.msra.mxu0 0.0
    %335 = vmatprep.subr.mxu0 0.0
    %336 = vmatpush1.msra.mxu0 0.0
    %337 = vmatprep.subr.mxu0 0.0
    %338 = vmatpush1.msra.mxu0 0.0
    %339 = vmatprep.subr.mxu0 0.0
    %340 = vmatpush1.msra.mxu0 0.0
    %341 = vmatprep.subr.mxu0 0.0
    %342 = vmatpush1.msra.mxu0 0.0
    %343 = vmatprep.subr.mxu0 0.0
    %344 = vmatpush1.msra.mxu0 0.0
    %345 = vmatprep.subr.mxu0 0.0
    %346 = vmatpush1.msra.mxu0 0.0
    %347 = vmatprep.subr.mxu0 0.0
    %348 = vmatpush1.msra.mxu0 0.0
    %349 = vmatprep.subr.mxu0 0.0
    %350 = vmatpush1.msra.mxu0 0.0
    %351 = vmatprep.subr.mxu0 0.0
    %352 = vmatpush1.msra.mxu0 0.0
    %353 = vmatprep.subr.mxu0 0.0
    %354 = vmatpush1.msra.mxu0 0.0
    %355 = vmatprep.subr.mxu0 0.0
    %356 = vmatpush1.msra.mxu0 %v176
    %357 = vmatprep.subr.mxu0 0.0
    %358 = vmatpush1.msra.mxu0 %v175
    %359 = vmatprep.subr.mxu0 0.0
    %360 = vmatpush1.msra.mxu0 %v174
    %361 = vmatprep.subr.mxu0 0.0
    %362 = vmatpush1.msra.mxu0 %v173
    %363 = vmatprep.subr.mxu0 0.0
    %364 = vmatpush2.msra.mxu0 0.0
    %365 = vmatprep.subr.mxu0 0.0
    %366 = vmatpush2.msra.mxu0 0.0
    %367 = vmatprep.subr.mxu0 0.0
    %368 = vmatpush2.msra.mxu0 0.0
    %369 = vmatprep.subr.mxu0 0.0
    %370 = vmatpush2.msra.mxu0 0.0
    %371 = vmatprep.subr.mxu0 0.0
    %372 = vmatpush2.msra.mxu0 0.0
    %373 = vmatprep.subr.mxu0 0.0
    %374 = vmatpush2.msra.mxu0 0.0
    %375 = vmatprep.subr.mxu0 0.0
    %376 = vmatpush2.msra.mxu0 0.0
    %377 = vmatprep.subr.mxu0 0.0
    %378 = vmatpush2.msra.mxu0 0.0
    %379 = vmatprep.subr.mxu0 0.0
    %380 = vmatpush2.msra.mxu0 0.0
    %381 = vmatprep.subr.mxu0 0.0
    %382 = vmatpush2.msra.mxu0 0.0
    %383 = vmatprep.subr.mxu0 0.0
    %384 = vmatpush2.msra.mxu0 0.0
    %385 = vmatprep.subr.mxu0 0.0
    %386 = vmatpush2.msra.mxu0 0.0
    %387 = vmatprep.subr.mxu0 0.0
    %388 = vmatpush2.msra.mxu0 0.0
    %389 = vmatprep.subr.mxu0 0.0
    %390 = vmatpush2.msra.mxu0 0.0
    %391 = vmatprep.subr.mxu0 0.0
    %392 = vmatpush2.msra.mxu0 0.0
    %393 = vmatprep.subr.mxu0 0.0
    %394 = vmatpush2.msra.mxu0 0.0
    %395 = vmatprep.mubr.f32.mxu0 0.0
    %396 = vmatmul.mubr.f32.gmra.mxu0 %v329
    %v397 = vpop.f32.mrf.mxu0
    %v398 = vadd.f32 0.0, %v397
    %v399 = vpop.f32.mrf.mxu0
    %400 = vdwg.mxu0
    %v401 = vadd.f32 %v150, %v398
    %v402 = vtanh.pop %v401
    %v404 = vsel %vm43, %v402, 0
    %406 = vmatprep.subr.mxu0 0.0
    %407 = vmatpush1.msra.mxu0 0.0
    %408 = vmatprep.subr.mxu0 0.0
    %409 = vmatpush1.msra.mxu0 0.0
    %410 = vmatprep.subr.mxu0 0.0
    %411 = vmatpush1.msra.mxu0 0.0
    %412 = vmatprep.subr.mxu0 0.0
    %413 = vmatpush1.msra.mxu0 0.0
    %414 = vmatprep.subr.mxu0 0.0
    %415 = vmatpush1.msra.mxu0 0.0
    %416 = vmatprep.subr.mxu0 0.0
    %417 = vmatpush1.msra.mxu0 0.0
    %418 = vmatprep.subr.mxu0 0.0
    %419 = vmatpush1.msra.mxu0 0.0
    %420 = vmatprep.subr.mxu0 0.0
    %421 = vmatpush1.msra.mxu0 0.0
    %422 = vmatprep.subr.mxu0 0.0
    %423 = vmatpush1.msra.mxu0 0.0
    %424 = vmatprep.subr.mxu0 0.0
    %425 = vmatpush1.msra.mxu0 0.0
    %426 = vmatprep.subr.mxu0 0.0
    %427 = vmatpush1.msra.mxu0 0.0
    %428 = vmatprep.subr.mxu0 0.0
    %429 = vmatpush1.msra.mxu0 0.0
    %430 = vmatprep.subr.mxu0 0.0
    %431 = vmatpush1.msra.mxu0 %v176
    %432 = vmatprep.subr.mxu0 0.0
    %433 = vmatpush1.msra.mxu0 %v175
    %434 = vmatprep.subr.mxu0 0.0
    %435 = vmatpush1.msra.mxu0 %v174
    %436 = vmatprep.subr.mxu0 0.0
    %437 = vmatpush1.msra.mxu0 %v173
    %438 = vmatprep.subr.mxu0 0.0
    %439 = vmatpush2.msra.mxu0 0.0
    %440 = vmatprep.subr.mxu0 0.0
    %441 = vmatpush2.msra.mxu0 0.0
    %442 = vmatprep.subr.mxu0 0.0
    %443 = vmatpush2.msra.mxu0 0.0
    %444 = vmatprep.subr.mxu0 0.0
    %445 = vmatpush2.msra.mxu0 0.0
    %446 = vmatprep.subr.mxu0 0.0
    %447 = vmatpush2.msra.mxu0 0.0
    %448 = vmatprep.subr.mxu0 0.0
    %449 = vmatpush2.msra.mxu0 0.0
    %450 = vmatprep.subr.mxu0 0.0
    %451 = vmatpush2.msra.mxu0 0.0
    %452 = vmatprep.subr.mxu0 0.0
    %453 = vmatpush2.msra.mxu0 0.0
    %454 = vmatprep.subr.mxu0 0.0
    %455 = vmatpush2.msra.mxu0 0.0
    %456 = vmatprep.subr.mxu0 0.0
    %457 = vmatpush2.msra.mxu0 0.0
    %458 = vmatprep.subr.mxu0 0.0
    %459 = vmatpush2.msra.mxu0 0.0
    %460 = vmatprep.subr.mxu0 0.0
    %461 = vmatpush2.msra.mxu0 0.0
    %462 = vmatprep.subr.mxu0 0.0
    %463 = vmatpush2.msra.mxu0 0.0
    %464 = vmatprep.subr.mxu0 0.0
    %465 = vmatpush2.msra.mxu0 0.0
    %466 = vmatprep.subr.mxu0 0.0
    %467 = vmatpush2.msra.mxu0 0.0
    %468 = vmatprep.subr.mxu0 0.0
    %469 = vmatpush2.msra.mxu0 0.0
    %470 = vmatprep.mubr.f32.mxu0 0.0
    %471 = vmatmul.mubr.f32.gmra.mxu0 %v404
    %v472 = vpop.f32.mrf.mxu0
    %v473 = vadd.f32 0.0, %v472
    %v474 = vpop.f32.mrf.mxu0
    %475 = vdwg.mxu0
    %v476 = vadd.f32 %v155, %v473
    %v477 = vtanh.pop %v476
    %v479 = vsel %vm43, %v477, 0
    %481 = vmatprep.subr.mxu0 0.0
    %482 = vmatpush1.msra.mxu0 0.0
    %483 = vmatprep.subr.mxu0 0.0
    %484 = vmatpush1.msra.mxu0 0.0
    %485 = vmatprep.subr.mxu0 0.0
    %486 = vmatpush1.msra.mxu0 0.0
    %487 = vmatprep.subr.mxu0 0.0
    %488 = vmatpush1.msra.mxu0 0.0
    %489 = vmatprep.subr.mxu0 0.0
    %490 = vmatpush1.msra.mxu0 0.0
    %491 = vmatprep.subr.mxu0 0.0
    %492 = vmatpush1.msra.mxu0 0.0
    %493 = vmatprep.subr.mxu0 0.0
    %494 = vmatpush1.msra.mxu0 0.0
    %495 = vmatprep.subr.mxu0 0.0
    %496 = vmatpush1.msra.mxu0 0.0
    %497 = vmatprep.subr.mxu0 0.0
    %498 = vmatpush1.msra.mxu0 0.0
    %499 = vmatprep.subr.mxu0 0.0
    %500 = vmatpush1.msra.mxu0 0.0
    %501 = vmatprep.subr.mxu0 0.0
    %502 = vmatpush1.msra.mxu0 0.0
    %503 = vmatprep.subr.mxu0 0.0
    %504 = vmatpush1.msra.mxu0 0.0
    %505 = vmatprep.subr.mxu0 0.0
    %506 = vmatpush1.msra.mxu0 %v176
    %507 = vmatprep.subr.mxu0 0.0
    %508 = vmatpush1.msra.mxu0 %v175
    %509 = vmatprep.subr.mxu0 0.0
    %510 = vmatpush1.msra.mxu0 %v174
    %511 = vmatprep.subr.mxu0 0.0
    %512 = vmatpush1.msra.mxu0 %v173
    %513 = vmatprep.subr.mxu0 0.0
    %514 = vmatpush2.msra.mxu0 0.0
    %515 = vmatprep.subr.mxu0 0.0
    %516 = vmatpush2.msra.mxu0 0.0
    %517 = vmatprep.subr.mxu0 0.0
    %518 = vmatpush2.msra.mxu0 0.0
    %519 = vmatprep.subr.mxu0 0.0
    %520 = vmatpush2.msra.mxu0 0.0
    %521 = vmatprep.subr.mxu0 0.0
    %522 = vmatpush2.msra.mxu0 0.0
    %523 = vmatprep.subr.mxu0 0.0
    %524 = vmatpush2.msra.mxu0 0.0
    %525 = vmatprep.subr.mxu0 0.0
    %526 = vmatpush2.msra.mxu0 0.0
    %527 = vmatprep.subr.mxu0 0.0
    %528 = vmatpush2.msra.mxu0 0.0
    %529 = vmatprep.subr.mxu0 0.0
    %530 = vmatpush2.msra.mxu0 0.0
    %531 = vmatprep.subr.mxu0 0.0
    %532 = vmatpush2.msra.mxu0 0.0
    %533 = vmatprep.subr.mxu0 0.0
    %534 = vmatpush2.msra.mxu0 0.0
    %535 = vmatprep.subr.mxu0 0.0
    %536 = vmatpush2.msra.mxu0 0.0
    %537 = vmatprep.subr.mxu0 0.0
    %538 = vmatpush2.msra.mxu0 0.0
    %539 = vmatprep.subr.mxu0 0.0
    %540 = vmatpush2.msra.mxu0 0.0
    %541 = vmatprep.subr.mxu0 0.0
    %542 = vmatpush2.msra.mxu0 0.0
    %543 = vmatprep.subr.mxu0 0.0
    %544 = vmatpush2.msra.mxu0 0.0
    %545 = vmatprep.mubr.f32.mxu0 0.0
    %546 = vmatmul.mubr.f32.gmra.mxu0 %v479
    %v547 = vpop.f32.mrf.mxu0
    %v548 = vadd.f32 0.0, %v547
    %v549 = vpop.f32.mrf.mxu0
    %550 = vdwg.mxu0
    %v551 = vadd.f32 %v160, %v548
    %v552 = vtanh.pop %v551
    %v554 = vsel %vm43, %v552, 0
    %556 = vmatprep.subr.mxu0 0.0
    %557 = vmatpush1.msra.mxu0 0.0
    %558 = vmatprep.subr.mxu0 0.0
    %559 = vmatpush1.msra.mxu0 0.0
    %560 = vmatprep.subr.mxu0 0.0
    %561 = vmatpush1.msra.mxu0 0.0
    %562 = vmatprep.subr.mxu0 0.0
    %563 = vmatpush1.msra.mxu0 0.0
    %564 = vmatprep.subr.mxu0 0.0
    %565 = vmatpush1.msra.mxu0 0.0
    %566 = vmatprep.subr.mxu0 0.0
    %567 = vmatpush1.msra.mxu0 0.0
    %568 = vmatprep.subr.mxu0 0.0
    %569 = vmatpush1.msra.mxu0 0.0
    %570 = vmatprep.subr.mxu0 0.0
    %571 = vmatpush1.msra.mxu0 0.0
    %572 = vmatprep.subr.mxu0 0.0
    %573 = vmatpush1.msra.mxu0 0.0
    %574 = vmatprep.subr.mxu0 0.0
    %575 = vmatpush1.msra.mxu0 0.0
    %576 = vmatprep.subr.mxu0 0.0
    %577 = vmatpush1.msra.mxu0 0.0
    %578 = vmatprep.subr.mxu0 0.0
    %579 = vmatpush1.msra.mxu0 0.0
    %580 = vmatprep.subr.mxu0 0.0
    %581 = vmatpush1.msra.mxu0 %v176
    %582 = vmatprep.subr.mxu0 0.0
    %583 = vmatpush1.msra.mxu0 %v175
    %584 = vmatprep.subr.mxu0 0.0
    %585 = vmatpush1.msra.mxu0 %v174
    %586 = vmatprep.subr.mxu0 0.0
    %587 = vmatpush1.msra.mxu0 %v173
    %588 = vmatprep.subr.mxu0 0.0
    %589 = vmatpush2.msra.mxu0 0.0
    %590 = vmatprep.subr.mxu0 0.0
    %591 = vmatpush2.msra.mxu0 0.0
    %592 = vmatprep.subr.mxu0 0.0
    %593 = vmatpush2.msra.mxu0 0.0
    %594 = vmatprep.subr.mxu0 0.0
    %595 = vmatpush2.msra.mxu0 0.0
    %596 = vmatprep.subr.mxu0 0.0
    %597 = vmatpush2.msra.mxu0 0.0
    %598 = vmatprep.subr.mxu0 0.0
    %599 = vmatpush2.msra.mxu0 0.0
    %600 = vmatprep.subr.mxu0 0.0
    %601 = vmatpush2.msra.mxu0 0.0
    %602 = vmatprep.subr.mxu0 0.0
    %603 = vmatpush2.msra.mxu0 0.0
    %604 = vmatprep.subr.mxu0 0.0
    %605 = vmatpush2.msra.mxu0 0.0
    %606 = vmatprep.subr.mxu0 0.0
    %607 = vmatpush2.msra.mxu0 0.0
    %608 = vmatprep.subr.mxu0 0.0
    %609 = vmatpush2.msra.mxu0 0.0
    %610 = vmatprep.subr.mxu0 0.0
    %611 = vmatpush2.msra.mxu0 0.0
    %612 = vmatprep.subr.mxu0 0.0
    %613 = vmatpush2.msra.mxu0 0.0
    %614 = vmatprep.subr.mxu0 0.0
    %615 = vmatpush2.msra.mxu0 0.0
    %616 = vmatprep.subr.mxu0 0.0
    %617 = vmatpush2.msra.mxu0 0.0
    %618 = vmatprep.subr.mxu0 0.0
    %619 = vmatpush2.msra.mxu0 0.0
    %620 = vmatprep.mubr.f32.mxu0 0.0
    %621 = vmatmul.mubr.f32.gmra.mxu0 %v554
    %v622 = vpop.f32.mrf.mxu0
    %v623 = vadd.f32 0.0, %v622
    %v624 = vpop.f32.mrf.mxu0
    %625 = vdwg.mxu0
    %v626 = vadd.f32 %v165, %v623
    %v627 = vtanh.pop %v626
    %v629 = vsel %vm43, %v627, 0
    %631 = vmatprep.subr.mxu0 0.0
    %632 = vmatpush1.msra.mxu0 0.0
    %633 = vmatprep.subr.mxu0 0.0
    %634 = vmatpush1.msra.mxu0 0.0
    %635 = vmatprep.subr.mxu0 0.0
    %636 = vmatpush1.msra.mxu0 0.0
    %637 = vmatprep.subr.mxu0 0.0
    %638 = vmatpush1.msra.mxu0 0.0
    %639 = vmatprep.subr.mxu0 0.0
    %640 = vmatpush1.msra.mxu0 0.0
    %641 = vmatprep.subr.mxu0 0.0
    %642 = vmatpush1.msra.mxu0 0.0
    %643 = vmatprep.subr.mxu0 0.0
    %644 = vmatpush1.msra.mxu0 0.0
    %645 = vmatprep.subr.mxu0 0.0
    %646 = vmatpush1.msra.mxu0 0.0
    %647 = vmatprep.subr.mxu0 0.0
    %648 = vmatpush1.msra.mxu0 0.0
    %649 = vmatprep.subr.mxu0 0.0
    %650 = vmatpush1.msra.mxu0 0.0
    %651 = vmatprep.subr.mxu0 0.0
    %652 = vmatpush1.msra.mxu0 0.0
    %653 = vmatprep.subr.mxu0 0.0
    %654 = vmatpush1.msra.mxu0 0.0
    %655 = vmatprep.subr.mxu0 0.0
    %656 = vmatpush1.msra.mxu0 %v176
    %657 = vmatprep.subr.mxu0 0.0
    %658 = vmatpush1.msra.mxu0 %v175
    %659 = vmatprep.subr.mxu0 0.0
    %660 = vmatpush1.msra.mxu0 %v174
    %661 = vmatprep.subr.mxu0 0.0
    %662 = vmatpush1.msra.mxu0 %v173
    %663 = vmatprep.subr.mxu0 0.0
    %664 = vmatpush2.msra.mxu0 0.0
    %665 = vmatprep.subr.mxu0 0.0
    %666 = vmatpush2.msra.mxu0 0.0
    %667 = vmatprep.subr.mxu0 0.0
    %668 = vmatpush2.msra.mxu0 0.0
    %669 = vmatprep.subr.mxu0 0.0
    %670 = vmatpush2.msra.mxu0 0.0
    %671 = vmatprep.subr.mxu0 0.0
    %672 = vmatpush2.msra.mxu0 0.0
    %673 = vmatprep.subr.mxu0 0.0
    %674 = vmatpush2.msra.mxu0 0.0
    %675 = vmatprep.subr.mxu0 0.0
    %676 = vmatpush2.msra.mxu0 0.0
    %677 = vmatprep.subr.mxu0 0.0
    %678 = vmatpush2.msra.mxu0 0.0
    %679 = vmatprep.subr.mxu0 0.0
    %680 = vmatpush2.msra.mxu0 0.0
    %681 = vmatprep.subr.mxu0 0.0
    %682 = vmatpush2.msra.mxu0 0.0
    %683 = vmatprep.subr.mxu0 0.0
    %684 = vmatpush2.msra.mxu0 0.0
    %685 = vmatprep.subr.mxu0 0.0
    %686 = vmatpush2.msra.mxu0 0.0
    %687 = vmatprep.subr.mxu0 0.0
    %688 = vmatpush2.msra.mxu0 0.0
    %689 = vmatprep.subr.mxu0 0.0
    %690 = vmatpush2.msra.mxu0 0.0
    %691 = vmatprep.subr.mxu0 0.0
    %692 = vmatpush2.msra.mxu0 0.0
    %693 = vmatprep.subr.mxu0 0.0
    %694 = vmatpush2.msra.mxu0 0.0
    %695 = vmatprep.mubr.f32.mxu0 0.0
    %696 = vmatmul.mubr.f32.gmra.mxu0 %v629
    %v697 = vpop.f32.mrf.mxu0
    %v698 = vadd.f32 0.0, %v697
    %v699 = vpop.f32.mrf.mxu0
    %700 = vdwg.mxu0
    %v701 = vadd.f32 %v170, %v698
    %v702 = vtanh.pop %v701
    %v703 = vld [vmem:[%s4] sm:$0xff]
    %v704 = vld [vmem:[%s4 + $0x8] sm:$0xff]
    %v705 = vld [vmem:[%s4 + $0x10] sm:$0xff]
    %v706 = vld [vmem:[%s4 + $0x18] sm:$0xff]
    %v707 = vld [vmem:[%s5] sm:$0x1]
    %v709 = vlaneseq
    %v710 = vshrl.u32 %v709, 7
    %v711 = vsub.s32 0, %v710
    %v712 = vrot.slane %v707, %v711
    %v715 = vsel %vm43, %v702, 0
    %717 = vmatprep.subr.mxu0 0.0
    %718 = vmatpush1.msra.mxu0 0.0
    %719 = vmatprep.subr.mxu0 0.0
    %720 = vmatpush1.msra.mxu0 0.0
    %721 = vmatprep.subr.mxu0 0.0
    %722 = vmatpush1.msra.mxu0 0.0
    %723 = vmatprep.subr.mxu0 0.0
    %724 = vmatpush1.msra.mxu0 0.0
    %725 = vmatprep.subr.mxu0 0.0
    %726 = vmatpush1.msra.mxu0 0.0
    %727 = vmatprep.subr.mxu0 0.0
    %728 = vmatpush1.msra.mxu0 0.0
    %729 = vmatprep.subr.mxu0 0.0
    %730 = vmatpush1.msra.mxu0 0.0
    %731 = vmatprep.subr.mxu0 0.0
    %732 = vmatpush1.msra.mxu0 0.0
    %733 = vmatprep.subr.mxu0 0.0
    %734 = vmatpush1.msra.mxu0 0.0
    %735 = vmatprep.subr.mxu0 0.0
    %736 = vmatpush1.msra.mxu0 0.0
    %737 = vmatprep.subr.mxu0 0.0
    %738 = vmatpush1.msra.mxu0 0.0
    %739 = vmatprep.subr.mxu0 0.0
    %740 = vmatpush1.msra.mxu0 0.0
    %741 = vmatprep.subr.mxu0 0.0
    %742 = vmatpush1.msra.mxu0 %v706
    %743 = vmatprep.subr.mxu0 0.0
    %744 = vmatpush1.msra.mxu0 %v705
    %745 = vmatprep.subr.mxu0 0.0
    %746 = vmatpush1.msra.mxu0 %v704
    %747 = vmatprep.subr.mxu0 0.0
    %748 = vmatpush1.msra.mxu0 %v703
    %749 = vmatprep.subr.mxu0 0.0
    %750 = vmatpush2.msra.mxu0 0.0
    %751 = vmatprep.subr.mxu0 0.0
    %752 = vmatpush2.msra.mxu0 0.0
    %753 = vmatprep.subr.mxu0 0.0
    %754 = vmatpush2.msra.mxu0 0.0
    %755 = vmatprep.subr.mxu0 0.0
    %756 = vmatpush2.msra.mxu0 0.0
    %757 = vmatprep.subr.mxu0 0.0
    %758 = vmatpush2.msra.mxu0 0.0
    %759 = vmatprep.subr.mxu0 0.0
    %760 = vmatpush2.msra.mxu0 0.0
    %761 = vmatprep.subr.mxu0 0.0
    %762 = vmatpush2.msra.mxu0 0.0
    %763 = vmatprep.subr.mxu0 0.0
    %764 = vmatpush2.msra.mxu0 0.0
    %765 = vmatprep.subr.mxu0 0.0
    %766 = vmatpush2.msra.mxu0 0.0
    %767 = vmatprep.subr.mxu0 0.0
    %768 = vmatpush2.msra.mxu0 0.0
    %769 = vmatprep.subr.mxu0 0.0
    %770 = vmatpush2.msra.mxu0 0.0
    %771 = vmatprep.subr.mxu0 0.0
    %772 = vmatpush2.msra.mxu0 0.0
    %773 = vmatprep.subr.mxu0 0.0
    %774 = vmatpush2.msra.mxu0 0.0
    %775 = vmatprep.subr.mxu0 0.0
    %776 = vmatpush2.msra.mxu0 0.0
    %777 = vmatprep.subr.mxu0 0.0
    %778 = vmatpush2.msra.mxu0 0.0
    %779 = vmatprep.subr.mxu0 0.0
    %780 = vmatpush2.msra.mxu0 0.0
    %781 = vmatprep.mubr.f32.mxu0 0.0
    %782 = vmatmul.mubr.f32.gmra.mxu0 %v715
    %v783 = vpop.f32.mrf.mxu0
    %v784 = vadd.f32 %v712, %v783
    %v785 = vpop.f32.mrf.mxu0
    %786 = vdwg.mxu0
    %vm787 = vcmask 39936
    %v788 = vsel %vm787, %v784, -inf
    %789 = vmax.xlane.f32.xlu0 %v788
    %v790 = vpop.xlane.xlu0 %789
    %v791 = vsub.f32 %v784, %v790
    %v792 = vmul.f32 %v791, 1.442695
    %v793 = vpow.pop %v792
    %v794 = vsel %vm787, %v793, 0.0
    %795 = vadd.xlane.f32.xlu0 %v794
    %v796 = vpop.xlane.xlu0 %795
    %v797 = vlog2.pop %v796
    %v798 = vmul.f32 %v797, 0.6931472
    %v799 = vsub.f32 %v791, %v798
    %800 = vst.msk [vmem:[#allocation2] sm:$0xff] %vm787, %v799
    // Predicated region
    $region26: #{rnn_forward.1} parent=1 // pred_check
      _
    $region27: #{rnn_forward.1} parent=1 // pred_check_branch
      %802 = sbr.rel (0) target = $region29
    $region28: #{rnn_forward.1} parent=1 // pred_region
      %s804 = ssub.s32 128, 128
      %805 = vsyncadd [#allocation3], %s804
      %s807 = sshll.u32 [#allocation2], 4
      %s808 = int_to_ptr.vmem [resolvable:$true] %s807
      %810 = dma.vmem_to_hbm [thread:$0]  %s808, 128, %s6, [#allocation3]
    $region29: #{rnn_forward.1} parent=1 // pred_fallthru
      _
    // Predicated region
    $region30: #{rnn_forward.1} parent=1 // pred_check
      _
    $region31: #{rnn_forward.1} parent=1 // pred_check_branch
      %812 = sbr.rel (0) target = $region33
    $region32: #{rnn_forward.1} parent=1 // pred_region
      %813 = dma.done [#allocation3], 128
    $region33: #{rnn_forward.1} parent=1 // pred_fallthru
      _
    %814 = vsyncpa [#allocation3], 1

</llo_original>
